<compile_context>
chip_gen: v7x
topology: tpu7x:2x2x1
jax: 0.10.0
libtpu: 0.0.40
codegen_flags: <defaults>
</compile_context>

<pallas_src>
import functools

import jax
import jax.numpy as jnp
from jax.experimental import pallas as pl
from jax.experimental.pallas import tpu as pltpu


def _triplet_loss_kernel(a_ref, p_ref, n_ref, o_ref, acc_ref, *,
                         margin, batch, tile_b, tiles_per_core):
    i = pl.program_id(1)          # batch-tile index within this core ("arbitrary")
    c = pl.program_id(0)          # partial-sum / core index ("parallel")

    @pl.when(i == 0)
    def _init():
        acc_ref[0] = jnp.float32(0.0)

    a = a_ref[...].astype(jnp.float32)
    p = p_ref[...].astype(jnp.float32)
    n = n_ref[...].astype(jnp.float32)

    # Fused: pos_dist - neg_dist = sum_d (n - p) * (2a - p - n)
    d = jnp.sum((n - p) * (2.0 * a - p - n), axis=1, keepdims=True)   # (TB, 1)
    hinge = jnp.maximum(d + jnp.float32(margin), 0.0)

    # Mask rows beyond B (last partial tile and fully out-of-range tiles on
    # the second core). `where` selects, so padded garbage / NaNs never leak.
    global_tile = c * tiles_per_core + i
    row_ids = global_tile * tile_b + jax.lax.broadcasted_iota(
        jnp.int32, (tile_b, 1), 0)
    hinge = jnp.where(row_ids < batch, hinge, 0.0)

    acc_ref[0] += jnp.sum(hinge)

    @pl.when(i == pl.num_programs(1) - 1)
    def _finalize():
        o_ref[0, 0] = acc_ref[0]          # per-core partial hinge sum


def triplet_loss(anchor, positive, negative, margin=1.0, *,
                 num_cores=2, max_tile_rows=1024):
    """Pallas equivalent of TripletLoss.forward. Inputs: (B, D). Returns f32 scalar."""
    B, D = anchor.shape
    assert positive.shape == (B, D) and negative.shape == (B, D)
    itemsize = jnp.dtype(anchor.dtype).itemsize

    # --- tile sizing: keep 3 inputs x 2 pipeline buffers under ~24 MiB -----
    vmem_budget = 24 * 1024 * 1024
    rows_fit = max(8, vmem_budget // max(1, 2 * 3 * D * itemsize))
    tile_b = int(min(max_tile_rows, rows_fit))
    if B <= tile_b:
        tile_b = B                          # full-dim block (always legal)
    else:
        tile_b = max(8, (tile_b // 8) * 8)  # sublane-aligned tile

    total_tiles = pl.cdiv(B, tile_b)
    num_cores = max(1, min(num_cores, total_tiles))
    tiles_per_core = pl.cdiv(total_tiles, num_cores)

    def in_index_map(c, i):
        # Clamp surplus tiles of the last core; their rows are masked anyway.
        t = jnp.minimum(c * tiles_per_core + i, total_tiles - 1)
        return (t, 0)

    kernel = functools.partial(
        _triplet_loss_kernel,
        margin=float(margin), batch=B, tile_b=tile_b,
        tiles_per_core=tiles_per_core)

    in_spec = pl.BlockSpec((tile_b, D), in_index_map)

    partials = pl.pallas_call(
        kernel,
        out_shape=jax.ShapeDtypeStruct((num_cores, 1), jnp.float32),
        grid_spec=pltpu.PrefetchScalarGridSpec(
            num_scalar_prefetch=0,
            grid=(num_cores, tiles_per_core),
            in_specs=[in_spec, in_spec, in_spec],
            out_specs=pl.BlockSpec((1, 1), lambda c, i: (c, 0),
                                   memory_space=pltpu.MemorySpace.SMEM),
            scratch_shapes=[pltpu.SMEM((1,), jnp.float32)],
        ),
        compiler_params=pltpu.CompilerParams(
            dimension_semantics=("parallel", "arbitrary"),
            vmem_limit_bytes=48 * 1024 * 1024,
        ),
        cost_estimate=pl.CostEstimate(
            flops=6 * B * D,
            transcendentals=0,
            bytes_accessed=3 * B * D * itemsize + num_cores * 4,
        ),
    )(anchor, positive, negative)

    # Sum the per-core partials and take the batch mean.
    return jnp.sum(partials) / B


def triplet_loss_ref(anchor, positive, negative, margin=1.0):
    """Pure-JAX reference matching the PyTorch semantics."""
    pos_dist = jnp.sum((anchor - positive) ** 2, axis=1)
    neg_dist = jnp.sum((anchor - negative) ** 2, axis=1)
    return jnp.mean(jax.nn.relu(pos_dist - neg_dist + margin))


if __name__ == "__main__":
    # Small embedding shapes implied by the module: (batch, feature), dim=1 reduce.
    key = jax.random.PRNGKey(0)
    k_a, k_p, k_n = jax.random.split(key, 3)
    B, D = 8, 32
    anchor = jax.random.normal(k_a, (B, D), dtype=jnp.float32)
    positive = jax.random.normal(k_p, (B, D), dtype=jnp.float32)
    negative = jax.random.normal(k_n, (B, D), dtype=jnp.float32)

    loss = jax.block_until_ready(triplet_loss(anchor, positive, negative, margin=1.0))
    ref = triplet_loss_ref(anchor, positive, negative, margin=1.0)
    assert jnp.allclose(loss, ref, rtol=1e-4, atol=1e-5), (loss, ref)

    # A batch that is NOT a multiple of the tile size, with a forced small tile,
    # to exercise the pipelined / masked / 2-way-split path.
    k_a2, k_p2, k_n2 = jax.random.split(jax.random.PRNGKey(1), 3)
    B2, D2 = 300, 256
    a2 = jax.random.normal(k_a2, (B2, D2), dtype=jnp.float32)
    p2 = jax.random.normal(k_p2, (B2, D2), dtype=jnp.float32)
    n2 = jax.random.normal(k_n2, (B2, D2), dtype=jnp.float32)
    loss2 = jax.block_until_ready(
        triplet_loss(a2, p2, n2, margin=1.0, max_tile_rows=64))
    ref2 = triplet_loss_ref(a2, p2, n2, margin=1.0)
    assert jnp.allclose(loss2, ref2, rtol=1e-4, atol=1e-5), (loss2, ref2)

    print("KERNEL_OK")
</pallas_src>

<mosaic_0001>
module attributes {stable_mosaic.version = 11 : i64} {
  func.func @_triplet_loss_kernel(%arg0: i32, %arg1: i32, %arg2: memref<8x32xf32, #tpu.memory_space<vmem>>, %arg3: memref<8x32xf32, #tpu.memory_space<vmem>>, %arg4: memref<8x32xf32, #tpu.memory_space<vmem>>, %arg5: memref<1x1xf32, #tpu.memory_space<smem>>, %arg6: memref<1xf32, #tpu.memory_space<smem>>) attributes {dimension_semantics = [#tpu.dimension_semantics<parallel>, #tpu.dimension_semantics<arbitrary>], iteration_bounds = array<i64: 1, 1>, scalar_prefetch = 0 : i64, scratch_operands = 1 : i64, tpu.core_type = #tpu.core_type<tc>, window_params = [{transform_indices = @transform_0, window_bounds = array<i64: 8, 32>}, {transform_indices = @transform_1, window_bounds = array<i64: 8, 32>}, {transform_indices = @transform_2, window_bounds = array<i64: 8, 32>}, {transform_indices = @transform_3, window_bounds = array<i64: 1, 1>}]} {
    %c0_i32 = arith.constant 0 : i32
    %0 = arith.cmpi eq, %arg1, %c0_i32 : i32
    %1 = arith.extui %0 : i1 to i32
    %c0_i32_0 = arith.constant 0 : i32
    %2 = arith.cmpi ne, %1, %c0_i32_0 : i32
    scf.if %2 {
      %cst_16 = arith.constant 0.000000e+00 : f32
      %c0_17 = arith.constant 0 : index
      %38 = memref.load %arg6[%c0_17] : memref<1xf32, #tpu.memory_space<smem>>
      memref.store %cst_16, %arg6[%c0_17] : memref<1xf32, #tpu.memory_space<smem>>
    } else {
    }
    %c0 = arith.constant 0 : index
    %c0_1 = arith.constant 0 : index
    %3 = vector.load %arg2[%c0, %c0_1] : memref<8x32xf32, #tpu.memory_space<vmem>>, vector<8x32xf32>
    %c0_2 = arith.constant 0 : index
    %c0_3 = arith.constant 0 : index
    %4 = vector.load %arg3[%c0_2, %c0_3] : memref<8x32xf32, #tpu.memory_space<vmem>>, vector<8x32xf32>
    %c0_4 = arith.constant 0 : index
    %c0_5 = arith.constant 0 : index
    %5 = vector.load %arg4[%c0_4, %c0_5] : memref<8x32xf32, #tpu.memory_space<vmem>>, vector<8x32xf32>
    %6 = arith.subf %5, %4 : vector<8x32xf32>
    %cst = arith.constant 2.000000e+00 : f32
    %7 = vector.broadcast %cst : f32 to vector<8x32xf32>
    %8 = arith.mulf %7, %3 : vector<8x32xf32>
    %9 = arith.subf %8, %4 : vector<8x32xf32>
    %10 = arith.subf %9, %5 : vector<8x32xf32>
    %11 = arith.mulf %6, %10 : vector<8x32xf32>
    %cst_6 = arith.constant dense<0.000000e+00> : vector<8xf32>
    %12 = vector.multi_reduction <add>, %11, %cst_6 [1] : vector<8x32xf32> to vector<8xf32>
    %13 = vector.shape_cast %12 : vector<8xf32> to vector<8x1xf32>
    %cst_7 = arith.constant 1.000000e+00 : f32
    %14 = vector.broadcast %cst_7 : f32 to vector<8x1xf32>
    %15 = arith.addf %13, %14 : vector<8x1xf32>
    %cst_8 = arith.constant 0.000000e+00 : f32
    %16 = vector.broadcast %cst_8 : f32 to vector<8x1xf32>
    %17 = arith.maximumf %15, %16 : vector<8x1xf32>
    %c1_i32 = arith.constant 1 : i32
    %18 = arith.muli %arg0, %c1_i32 : i32
    %19 = arith.addi %18, %arg1 : i32
    %c8_i32 = arith.constant 8 : i32
    %20 = arith.muli %19, %c8_i32 : i32
    %21 = tpu.iota {dimensions = array<i32: 0>} : vector<8x1xi32>
    %22 = vector.broadcast %20 : i32 to vector<8x1xi32>
    %23 = arith.addi %22, %21 : vector<8x1xi32>
    %c8_i32_9 = arith.constant 8 : i32
    %24 = vector.broadcast %c8_i32_9 : i32 to vector<8x1xi32>
    %25 = arith.cmpi slt, %23, %24 : vector<8x1xi32>
    %cst_10 = arith.constant 0.000000e+00 : f32
    %26 = vector.broadcast %cst_10 : f32 to vector<8x1xf32>
    %27 = arith.select %25, %17, %26 : vector<8x1xi1>, vector<8x1xf32>
    %c0_11 = arith.constant 0 : index
    %28 = memref.load %arg6[%c0_11] : memref<1xf32, #tpu.memory_space<smem>>
    %29 = vector.shape_cast %27 : vector<8x1xf32> to vector<1x8x1xf32>
    %cst_12 = arith.constant dense<0.000000e+00> : vector<1xf32>
    %30 = vector.multi_reduction <add>, %29, %cst_12 [1, 2] : vector<1x8x1xf32> to vector<1xf32>
    %31 = vector.shape_cast %30 : vector<1xf32> to vector<1x1x1xf32>
    %32 = vector.extract %31[0, 0, 0] : f32 from vector<1x1x1xf32>
    %33 = arith.addf %28, %32 : f32
    %c0_13 = arith.constant 0 : index
    %34 = memref.load %arg6[%c0_13] : memref<1xf32, #tpu.memory_space<smem>>
    memref.store %33, %arg6[%c0_13] : memref<1xf32, #tpu.memory_space<smem>>
    %c0_i32_14 = arith.constant 0 : i32
    %35 = arith.cmpi eq, %arg1, %c0_i32_14 : i32
    %36 = arith.extui %35 : i1 to i32
    %c0_i32_15 = arith.constant 0 : i32
    %37 = arith.cmpi ne, %36, %c0_i32_15 : i32
    scf.if %37 {
      %c0_16 = arith.constant 0 : index
      %38 = memref.load %arg6[%c0_16] : memref<1xf32, #tpu.memory_space<smem>>
      %c0_17 = arith.constant 0 : index
      %c0_18 = arith.constant 0 : index
      %39 = memref.load %arg5[%c0_17, %c0_18] : memref<1x1xf32, #tpu.memory_space<smem>>
      memref.store %38, %arg5[%c0_17, %c0_18] : memref<1x1xf32, #tpu.memory_space<smem>>
    } else {
    }
    return
  }
  func.func @transform_0(%arg0: i32, %arg1: i32) -> (i32, i32) {
    %c1_i32 = arith.constant 1 : i32
    %0 = arith.muli %arg0, %c1_i32 : i32
    %1 = arith.addi %0, %arg1 : i32
    %c0_i32 = arith.constant 0 : i32
    %2 = arith.minsi %1, %c0_i32 : i32
    %c0_i32_0 = arith.constant 0 : i32
    %c0_i32_1 = arith.constant 0 : i32
    return %2, %c0_i32_0 : i32, i32
  }
  func.func @transform_1(%arg0: i32, %arg1: i32) -> (i32, i32) {
    %c1_i32 = arith.constant 1 : i32
    %0 = arith.muli %arg0, %c1_i32 : i32
    %1 = arith.addi %0, %arg1 : i32
    %c0_i32 = arith.constant 0 : i32
    %2 = arith.minsi %1, %c0_i32 : i32
    %c0_i32_0 = arith.constant 0 : i32
    %c0_i32_1 = arith.constant 0 : i32
    return %2, %c0_i32_0 : i32, i32
  }
  func.func @transform_2(%arg0: i32, %arg1: i32) -> (i32, i32) {
    %c1_i32 = arith.constant 1 : i32
    %0 = arith.muli %arg0, %c1_i32 : i32
    %1 = arith.addi %0, %arg1 : i32
    %c0_i32 = arith.constant 0 : i32
    %2 = arith.minsi %1, %c0_i32 : i32
    %c0_i32_0 = arith.constant 0 : i32
    %c0_i32_1 = arith.constant 0 : i32
    return %2, %c0_i32_0 : i32, i32
  }
  func.func @transform_3(%arg0: i32, %arg1: i32) -> (i32, i32) {
    %c0_i32 = arith.constant 0 : i32
    %c0_i32_0 = arith.constant 0 : i32
    return %arg0, %c0_i32 : i32, i32
  }
}

</mosaic_0001>

<llo_original>
// kernel: tpu_custom_call.1
$region0: #{tpu_custom_call.1}
  #allocation0 [shape = 'u32[]', space=smem, size = 0x4, offset = 0x4, fixed_abs, tag = 'smem constant byte address 0x4 - core index']
  #allocation1 [shape = 'u32[144,128]{1,0:T(1,128)}', space=vmem, size = 0x12000, scoped, tag = 'internal scratch']
  #allocation2 [shape = 'f32[1]{0:T(128)}', space=smem, size = 0x200, scoped, tag = 'scratch operand']
  %s0 = inlined_call_operand.hbm [shape: f32[8,32], index: 0, kind: input, shape index: {}]
  %s1 = inlined_call_operand.hbm [shape: f32[8,32], index: 1, kind: input, shape index: {}]
  %s2 = inlined_call_operand.hbm [shape: f32[8,32], index: 2, kind: input, shape index: {}]
  %s3 = inlined_call_operand.hbm [shape: f32[1,1], index: 3, kind: output, shape index: {}]
  %s4 = sld [smem:[#allocation0]]
  $region42: #{tpu_custom_call.1} parent=0
    _
  %s6 = ssub.s32 1, %s4
  %s7 = scalar_select 0, %s6, %s4
  $region1: #{tpu_custom_call.1} parent=0
    #allocation3 [shape = 'u8[4096]{0}', space=vmem, size = 0x1000, scoped, tag = 'input window, operand 0, single buffered']
    #allocation4 [shape = 's32[1]{0}', space=sflag, size = 0x4, scoped, tag = 'scoped memory for tpu_custom_call.1']
    #allocation5 [shape = 's32[1]{0}', space=sflag, size = 0x4, scoped, tag = 'scoped memory for tpu_custom_call.1']
    #allocation6 [shape = 'u8[4096]{0}', space=vmem, size = 0x1000, scoped, tag = 'input window, operand 1, single buffered']
    #allocation7 [shape = 's32[1]{0}', space=sflag, size = 0x4, scoped, tag = 'scoped memory for tpu_custom_call.1']
    #allocation8 [shape = 'u8[4096]{0}', space=vmem, size = 0x1000, scoped, tag = 'input window, operand 2, single buffered']
    #allocation9 [shape = 'u8[512]{0}', space=smem, size = 0x200, scoped, tag = 'output window, operand 0, single buffered']
    %8 = vsyncpa [#allocation4], 0
    %9 = vsyncpa [#allocation7], 0
    %10 = vsyncpa [#allocation5], 0
    // Predicated region
    $region2: #{tpu_custom_call.1} parent=1 // pred_check
      _
    $region3: #{tpu_custom_call.1} parent=1 // pred_check_branch
      %12 = sbr.rel (0) target = $region5
    $region4: #{tpu_custom_call.1} parent=1 // pred_region
      %s13 = sadd.s32 0, 0
      %p14 = scmp.lt.s32.totalorder %s13, 0
      %s15 = scalar_select %p14, %s13, 0
      %s17 = ssub.s32 128, 128
      %18 = vsyncadd [#allocation4], %s17
      %s19 = smul.addr %s15, 128
      %s20 = scalar_lea.hbm %s0, %s19
      %s22 = sshll.u32 [#allocation3], 4
      %s23 = int_to_ptr.vmem [resolvable:$true] %s22
      %25 = dma.hbm_to_vmem [thread:$0]  %s20, 128, %s23, [#allocation4]
    $region5: #{tpu_custom_call.1} parent=1 // pred_fallthru
      _
    // Predicated region
    $region6: #{tpu_custom_call.1} parent=1 // pred_check
      _
    $region7: #{tpu_custom_call.1} parent=1 // pred_check_branch
      %27 = sbr.rel (0) target = $region9
    $region8: #{tpu_custom_call.1} parent=1 // pred_region
      %s28 = sadd.s32 0, 0
      %p29 = scmp.lt.s32.totalorder %s28, 0
      %s30 = scalar_select %p29, %s28, 0
      %s32 = ssub.s32 128, 128
      %33 = vsyncadd [#allocation7], %s32
      %s34 = smul.addr %s30, 128
      %s35 = scalar_lea.hbm %s1, %s34
      %s37 = sshll.u32 [#allocation6], 4
      %s38 = int_to_ptr.vmem [resolvable:$true] %s37
      %40 = dma.hbm_to_vmem [thread:$0]  %s35, 128, %s38, [#allocation7]
    $region9: #{tpu_custom_call.1} parent=1 // pred_fallthru
      _
    // Predicated region
    $region10: #{tpu_custom_call.1} parent=1 // pred_check
      _
    $region11: #{tpu_custom_call.1} parent=1 // pred_check_branch
      %42 = sbr.rel (0) target = $region13
    $region12: #{tpu_custom_call.1} parent=1 // pred_region
      %s43 = sadd.s32 0, 0
      %p44 = scmp.lt.s32.totalorder %s43, 0
      %s45 = scalar_select %p44, %s43, 0
      %s47 = ssub.s32 128, 128
      %48 = vsyncadd [#allocation7], %s47
      %s49 = smul.addr %s45, 128
      %s50 = scalar_lea.hbm %s2, %s49
      %s52 = sshll.u32 [#allocation8], 4
      %s53 = int_to_ptr.vmem [resolvable:$true] %s52
      %55 = dma.hbm_to_vmem [thread:$0]  %s50, 128, %s53, [#allocation7]
    $region13: #{tpu_custom_call.1} parent=1 // pred_fallthru
      _
    // Predicated region
    $region14: #{tpu_custom_call.1} parent=1 // pred_check
      _
    $region15: #{tpu_custom_call.1} parent=1 // pred_check_branch
      %57 = sbr.rel (0) target = $region17
    $region16: #{tpu_custom_call.1} parent=1 // pred_region
      %58 = dma.done [#allocation4], 128
    $region17: #{tpu_custom_call.1} parent=1 // pred_fallthru
      _
    // Predicated region
    $region18: #{tpu_custom_call.1} parent=1 // pred_check
      _
    $region19: #{tpu_custom_call.1} parent=1 // pred_check_branch
      %60 = sbr.rel (0) target = $region21
    $region20: #{tpu_custom_call.1} parent=1 // pred_region
      %61 = dma.done [#allocation7], 128
    $region21: #{tpu_custom_call.1} parent=1 // pred_fallthru
      _
    // Predicated region
    $region22: #{tpu_custom_call.1} parent=1 // pred_check
      _
    $region23: #{tpu_custom_call.1} parent=1 // pred_check_branch
      %63 = sbr.rel (0) target = $region25
    $region24: #{tpu_custom_call.1} parent=1 // pred_region
      %64 = dma.done [#allocation7], 128
    $region25: #{tpu_custom_call.1} parent=1 // pred_fallthru
      _
    %s65 = sadd.s32 0, 0
    %p66 = scmp.lt.s32.totalorder %s65, 0
    %s67 = scalar_select %p66, %s65, 0
    %s68 = sadd.s32 0, 0
    %p69 = scmp.lt.s32.totalorder %s68, 0
    %s70 = scalar_select %p69, %s68, 0
    %s71 = sadd.s32 0, 0
    %p72 = scmp.lt.s32.totalorder %s71, 0
    %s73 = scalar_select %p72, %s71, 0
    %p74 = scmp.eq.s32.totalorder 0, 0
    // Predicated region
    $region26: #{tpu_custom_call.1} parent=1 // pred_check
      %p75 = pneg %p74
    $region27: #{tpu_custom_call.1} parent=1 // pred_check_branch
      %77 = sbr.rel (%p75) target = $region29
    $region28: #{tpu_custom_call.1} parent=1 // pred_region
      %s78 = scalar_lea.smem [#allocation2], 0
      %79 = sst [smem:[%s78]] 0.0
    $region29: #{tpu_custom_call.1} parent=1 // pred_fallthru
      _
    %v80 = vld [vmem:[#allocation3] sm:$0xff]
    %v81 = vld [vmem:[#allocation6] sm:$0xff]
    %v82 = vld [vmem:[#allocation8] sm:$0xff]
    %v83 = vsub.f32 %v82, %v81
    %v84 = vmul.f32 %v80, 2.0
    %v85 = vsub.f32 %v84, %v81
    %v86 = vsub.f32 %v85, %v82
    %v87 = vmul.f32 %v83, %v86
    %vm88 = vcmask 261120
    %v89 = vsel %vm88, %v87, 0.0
    %90 = vadd.xlane.f32.xlu0 %v89
    %v91 = vpop.xlane.xlu0 %90
    %v92 = vadd.f32 %v91, 1.0
    %v93 = vmax.f32 %v92, 0.0
    %s94 = sadd.s32 0, 0
    %s95 = smul.u32 %s94, 8
    %v96 = vlaneseq
    %v97 = vshrl.u32 %v96, 7
    %v98 = vstv %s95
    %v99 = vadd.s32 %v98, %v97
    %vm100 = vcmp.lt.s32.totalorder %v99, 8
    %v101 = vsel %vm100, %v93, 0.0
    %s102 = sld [smem:[#allocation2]]
    %vm103 = vcmask 7168
    %v104 = vsel %vm103, %v101, 0.0
    %105 = vadd.xlane.f32.xlu0 %v104
    %v106 = vpop.xlane.xlu0 %105
    %v107 = vrot.slane %v106, 4
    %v108 = vadd.f32 %v106, %v107
    %v109 = vrot.slane %v108, 2
    %v110 = vadd.f32 %v108, %v109
    %v111 = vrot.slane %v110, 1
    %v112 = vadd.f32 %v110, %v111
    %s113 = vtos %v112
    %s114 = sadd.f32 %s102, %s113
    %s115 = scalar_lea.smem [#allocation2], 0
    %116 = sst [smem:[%s115]] %s114
    // Predicated region
    $region30: #{tpu_custom_call.1} parent=1 // pred_check
      %p117 = pneg %p74
    $region31: #{tpu_custom_call.1} parent=1 // pred_check_branch
      %119 = sbr.rel (%p117) target = $region33
    $region32: #{tpu_custom_call.1} parent=1 // pred_region
      %s120 = sld [smem:[#allocation2]]
      %s121 = scalar_lea.smem [#allocation9], 0
      %122 = sst [smem:[%s121]] %s120
    $region33: #{tpu_custom_call.1} parent=1 // pred_fallthru
      _
    // Predicated region
    $region34: #{tpu_custom_call.1} parent=1 // pred_check
      _
    $region35: #{tpu_custom_call.1} parent=1 // pred_check_branch
      %124 = sbr.rel (0) target = $region37
    $region36: #{tpu_custom_call.1} parent=1 // pred_region
      %s126 = ssub.s32 16, 16
      %127 = vsyncadd [#allocation5], %s126
      %130 = dma.smem_to_hbm [#allocation9], 16, %s3, [#allocation5]
    $region37: #{tpu_custom_call.1} parent=1 // pred_fallthru
      _
    // Predicated region
    $region38: #{tpu_custom_call.1} parent=1 // pred_check
      _
    $region39: #{tpu_custom_call.1} parent=1 // pred_check_branch
      %132 = sbr.rel (0) target = $region41
    $region40: #{tpu_custom_call.1} parent=1 // pred_region
      %133 = dma.done [#allocation5], 16
    $region41: #{tpu_custom_call.1} parent=1 // pred_fallthru
      _
    %134 = sfence
    %135 = vsyncpa [#allocation4], 1
    %136 = vsyncpa [#allocation7], 1
    %137 = vsyncpa [#allocation5], 1

</llo_original>
